<compile_context>
chip_gen: v5e
topology: v5e:2x2
jax: 0.10.0
libtpu: 0.0.40
codegen_flags: <defaults>
</compile_context>

<pallas_src>
import jax
import jax.numpy as jnp
from jax.experimental import pallas as pl
from jax.experimental.pallas import tpu as pltpu

LANE = 128
SUBLANE_F32 = 8


def _round_up(x, m):
    return ((x + m - 1) // m) * m


def _vmem_limit_bytes():
    """Scoped-VMEM limit: ~3/4 of physical VMEM, capped at 96 MiB (safe on v5e/v6e/v7x)."""
    try:
        phys = pltpu.get_tpu_info().vmem_capacity_bytes
    except Exception:
        phys = 64 * 1024 * 1024  # conservative fallback (v7x-sized VMEM)
    return int(min(phys * 3 // 4, 96 * 1024 * 1024))


def _pick_tile(dim_pad, unit, max_tile):
    """Largest multiple of `unit` that divides `dim_pad` and is <= max_tile (>= unit)."""
    n_units = dim_pad // unit
    best = 1
    for d in range(1, n_units + 1):
        if n_units % d == 0 and d * unit <= max_tile:
            best = d
    return best * unit


def _choose_tm(M, tm_max):
    tm = min(tm_max, _round_up(M, SUBLANE_F32))
    # Prefer >= 2 row blocks so both TensorCores of a dual-core chip (v7x) get work.
    if M >= 2 * SUBLANE_F32 and _round_up(M, tm) // tm < 2:
        tm = min(tm_max, _round_up((M + 1) // 2, SUBLANE_F32))
    return tm


# ---------------------------------------------------------------------------
# Parameter prep (one-time: pad + bf16 cast, so no per-forward weight copies).
# ---------------------------------------------------------------------------
def init_fc_params(key, dims, dtype=jnp.float32):
    """PyTorch-style uniform(-1/sqrt(in), 1/sqrt(in)) init; weights stored as (in, out)."""
    params = []
    for in_dim, out_dim in zip(dims[:-1], dims[1:]):
        key, kw, kb = jax.random.split(key, 3)
        bound = 1.0 / (in_dim ** 0.5)
        w = jax.random.uniform(kw, (in_dim, out_dim), dtype, -bound, bound)
        b = jax.random.uniform(kb, (out_dim,), dtype, -bound, bound)
        params.append((w, b))
    return params


def prepare_fc_params(params):
    """Pad weights/biases to lane-aligned shapes once and cast weights to bf16 for streaming."""
    prepped = []
    for w, b in params:
        K, N = w.shape
        Kp, Np = _round_up(K, LANE), _round_up(N, LANE)
        wp = jnp.pad(w, ((0, Kp - K), (0, Np - N))).astype(jnp.bfloat16)
        bp = jnp.pad(b, (0, Np - N)).astype(jnp.float32).reshape(1, Np)
        prepped.append((wp, bp))
    return prepped


# ---------------------------------------------------------------------------
# Fused whole-stack kernel (weights resident in VMEM, grid over M only).
# ---------------------------------------------------------------------------
def _make_fused_kernel(num_layers):
    def kernel(*refs):
        x_ref = refs[0]
        o_ref = refs[-1]
        y = x_ref[...].astype(jnp.float32)
        for l in range(num_layers):
            w_ref = refs[1 + 2 * l]
            b_ref = refs[2 + 2 * l]
            y = jnp.dot(y.astype(jnp.bfloat16), w_ref[...],
                        preferred_element_type=jnp.float32)
            y = jnp.maximum(y + b_ref[...], 0.0)
        o_ref[...] = y.astype(o_ref.dtype)
    return kernel


def _fused_forward(x, prepped, *, vmem_limit, tm_max=256):
    M, K = x.shape
    K0p = prepped[0][0].shape[0]
    Nlp = prepped[-1][0].shape[1]

    tm = _choose_tm(M, tm_max)
    M_pad = _round_up(M, tm)

    xp = x.astype(jnp.float32)
    if (M_pad, K0p) != (M, K):
        xp = jnp.pad(xp, ((0, M_pad - M), (0, K0p - K)))

    in_specs = [pl.BlockSpec((tm, K0p), lambda i: (i, 0))]
    args = [xp]
    for wp, bp in prepped:
        Kp, Np = wp.shape
        in_specs.append(pl.BlockSpec((Kp, Np), lambda i: (0, 0)))
        in_specs.append(pl.BlockSpec((1, Np), lambda i: (0, 0)))
        args.append(wp)
        args.append(bp)

    return pl.pallas_call(
        _make_fused_kernel(len(prepped)),
        out_shape=jax.ShapeDtypeStruct((M_pad, Nlp), jnp.float32),
        grid_spec=pltpu.PrefetchScalarGridSpec(
            num_scalar_prefetch=0,
            grid=(M_pad // tm,),
            in_specs=in_specs,
            out_specs=pl.BlockSpec((tm, Nlp), lambda i: (i, 0)),
        ),
        compiler_params=pltpu.CompilerParams(
            dimension_semantics=("parallel",),
            vmem_limit_bytes=vmem_limit,
        ),
    )(*args)


# ---------------------------------------------------------------------------
# Tiled per-layer fallback (for weight stacks too large to keep resident).
# ---------------------------------------------------------------------------
def _linear_relu_tiled_kernel(x_ref, w_ref, b_ref, o_ref):
    """One (tm, tn) tile of ReLU(x @ w + b).  k is the trailing reduction grid axis and the
    f32 output block is resident across it, so we accumulate directly into o_ref."""
    k = pl.program_id(2)

    @pl.when(k == 0)
    def _():
        o_ref[...] = jnp.zeros_like(o_ref)

    o_ref[...] += jnp.dot(x_ref[...].astype(jnp.bfloat16), w_ref[...],
                          preferred_element_type=jnp.float32)

    @pl.when(k == pl.num_programs(2) - 1)
    def _():
        o_ref[...] = jnp.maximum(o_ref[...] + b_ref[...], 0.0)


def _linear_relu_tiled(xp, wp, bp, *, tm, tn_max, tk_max, vmem_limit):
    M_pad, Kp = xp.shape
    Kw, Np = wp.shape
    assert Kw == Kp
    tk = _pick_tile(Kp, LANE, tk_max)
    tn = _pick_tile(Np, LANE, tn_max)
    grid = (M_pad // tm, Np // tn, Kp // tk)

    return pl.pallas_call(
        _linear_relu_tiled_kernel,
        out_shape=jax.ShapeDtypeStruct((M_pad, Np), jnp.float32),
        grid_spec=pltpu.PrefetchScalarGridSpec(
            num_scalar_prefetch=0,
            grid=grid,
            in_specs=[
                pl.BlockSpec((tm, tk), lambda i, j, k: (i, k)),
                pl.BlockSpec((tk, tn), lambda i, j, k: (k, j)),
                pl.BlockSpec((1, tn), lambda i, j, k: (0, j)),
            ],
            out_specs=pl.BlockSpec((tm, tn), lambda i, j, k: (i, j)),
        ),
        compiler_params=pltpu.CompilerParams(
            dimension_semantics=("parallel", "parallel", "arbitrary"),
            vmem_limit_bytes=vmem_limit,
        ),
    )(xp, wp, bp)


def _tiled_forward(x, prepped, *, vmem_limit, tm_max=256):
    M, K = x.shape
    K0p = prepped[0][0].shape[0]

    tm = _choose_tm(M, tm_max)
    M_pad = _round_up(M, tm)

    # Bigger tiles when more VMEM is available (v5e/v6e with raised limit); stay
    # conservative for v7x's 64 MiB VMEM.
    big = vmem_limit >= 80 * 1024 * 1024
    tn_max = 1024 if big else 512
    tk_max = 1024 if big else 512

    y = x.astype(jnp.float32)
    if (M_pad, K0p) != (M, K):
        y = jnp.pad(y, ((0, M_pad - M), (0, K0p - K)))
    # Carry the lane-padded activation through the whole chain; slice only at the end.
    # (Padded activation columns are exactly zero because padded weight/bias entries are 0.)
    for wp, bp in prepped:
        y = _linear_relu_tiled(y, wp, bp, tm=tm, tn_max=tn_max, tk_max=tk_max,
                               vmem_limit=vmem_limit)
    return y


# ---------------------------------------------------------------------------
# FCLayer.forward
# ---------------------------------------------------------------------------
def fc_layer_forward(x, prepped, out_dim, *, force_tiled=False):
    """FCLayer.forward with act='ReLU', dropout=0, batchnorm_dim=0 (module defaults):
    every Linear, including the last, is followed by ReLU."""
    # TODO(synk): Dropout / BatchNorm1d branches of FCLayer are default-off and not implemented.
    M = x.shape[0]
    vmem_limit = _vmem_limit_bytes()

    weight_bytes = sum(int(w.size) * w.dtype.itemsize + int(b.size) * b.dtype.itemsize
                       for w, b in prepped)
    # 2x for double-buffered input blocks; keep headroom for activation blocks / temps.
    fused_ok = (2 * weight_bytes) <= vmem_limit // 2

    if fused_ok and not force_tiled:
        out = _fused_forward(x, prepped, vmem_limit=vmem_limit)
    else:
        out = _tiled_forward(x, prepped, vmem_limit=vmem_limit)
    return out[:M, :out_dim].astype(x.dtype)


if __name__ == "__main__":
    key = jax.random.PRNGKey(0)
    dims = (32, 64, 16)   # FCLayer(dims): Linear(32,64)+ReLU, Linear(64,16)+ReLU
    batch = 8

    kx, kp = jax.random.split(key)
    x = jax.random.normal(kx, (batch, dims[0]), dtype=jnp.float32)
    params = init_fc_params(kp, dims)
    prepped = prepare_fc_params(params)   # one-time pad + bf16 cast

    y_fused = fc_layer_forward(x, prepped, dims[-1])                     # fused-stack path
    y_tiled = fc_layer_forward(x, prepped, dims[-1], force_tiled=True)   # tiled fallback path
    jax.block_until_ready((y_fused, y_tiled))

    # Reference matching the kernel's numerics (bf16 matmul inputs, f32 accumulation),
    # plus a looser sanity check against the pure-f32 forward.
    y_bf16_ref = x
    y_f32_ref = x
    for w, b in params:
        y_bf16_ref = jnp.maximum(
            jnp.dot(y_bf16_ref.astype(jnp.bfloat16), w.astype(jnp.bfloat16),
                    preferred_element_type=jnp.float32) + b, 0.0)
        y_f32_ref = jnp.maximum(y_f32_ref @ w + b, 0.0)

    assert y_fused.shape == (batch, dims[-1]) and y_fused.dtype == x.dtype
    assert y_tiled.shape == (batch, dims[-1]) and y_tiled.dtype == x.dtype
    assert jnp.allclose(y_fused, y_bf16_ref, atol=1e-3, rtol=1e-3), "fused path mismatch"
    assert jnp.allclose(y_tiled, y_bf16_ref, atol=1e-3, rtol=1e-3), "tiled path mismatch"
    assert jnp.allclose(y_fused, y_f32_ref, atol=5e-2, rtol=5e-2), "drift vs f32 reference"

    print("KERNEL_OK")
</pallas_src>

<mosaic_0001>
module attributes {stable_mosaic.version = 11 : i64} {
  func.func @kernel(%arg0: i32, %arg1: memref<8x128xf32, #tpu.memory_space<vmem>>, %arg2: memref<128x128xbf16, #tpu.memory_space<vmem>>, %arg3: memref<1x128xf32, #tpu.memory_space<vmem>>, %arg4: memref<128x128xbf16, #tpu.memory_space<vmem>>, %arg5: memref<1x128xf32, #tpu.memory_space<vmem>>, %arg6: memref<8x128xf32, #tpu.memory_space<vmem>>) attributes {dimension_semantics = [#tpu.dimension_semantics<parallel>], iteration_bounds = array<i64: 1>, scalar_prefetch = 0 : i64, scratch_operands = 0 : i64, tpu.core_type = #tpu.core_type<tc>, window_params = [{transform_indices = @transform_0, window_bounds = array<i64: 8, 128>}, {pipeline_mode = #tpu.pipeline_mode<synchronous>, transform_indices = @transform_1, window_bounds = array<i64: 128, 128>}, {pipeline_mode = #tpu.pipeline_mode<synchronous>, transform_indices = @transform_2, window_bounds = array<i64: 1, 128>}, {pipeline_mode = #tpu.pipeline_mode<synchronous>, transform_indices = @transform_3, window_bounds = array<i64: 128, 128>}, {pipeline_mode = #tpu.pipeline_mode<synchronous>, transform_indices = @transform_4, window_bounds = array<i64: 1, 128>}, {transform_indices = @transform_5, window_bounds = array<i64: 8, 128>}]} {
    %c0 = arith.constant 0 : index
    %c0_0 = arith.constant 0 : index
    %0 = vector.load %arg1[%c0, %c0_0] : memref<8x128xf32, #tpu.memory_space<vmem>>, vector<8x128xf32>
    %1 = arith.truncf %0 : vector<8x128xf32> to vector<8x128xbf16>
    %c0_1 = arith.constant 0 : index
    %c0_2 = arith.constant 0 : index
    %2 = vector.load %arg2[%c0_1, %c0_2] : memref<128x128xbf16, #tpu.memory_space<vmem>>, vector<128x128xbf16>
    %cst = arith.constant dense<0.000000e+00> : vector<8x128xf32>
    %3 = tpu.matmul %1, %2, %cst {dimension_numbers = #tpu.dot_dimension_numbers<[1], [0], [0], [1], [0, 0, 1, 1], [], []>} : vector<8x128xbf16>, vector<128x128xbf16>, vector<8x128xf32> -> vector<8x128xf32>
    %c0_3 = arith.constant 0 : index
    %c0_4 = arith.constant 0 : index
    %4 = vector.load %arg3[%c0_3, %c0_4] : memref<1x128xf32, #tpu.memory_space<vmem>>, vector<1x128xf32>
    %5 = vector.broadcast %4 : vector<1x128xf32> to vector<8x128xf32>
    %6 = arith.addf %3, %5 : vector<8x128xf32>
    %cst_5 = arith.constant 0.000000e+00 : f32
    %7 = vector.broadcast %cst_5 : f32 to vector<8x128xf32>
    %8 = arith.maximumf %6, %7 : vector<8x128xf32>
    %9 = arith.truncf %8 : vector<8x128xf32> to vector<8x128xbf16>
    %c0_6 = arith.constant 0 : index
    %c0_7 = arith.constant 0 : index
    %10 = vector.load %arg4[%c0_6, %c0_7] : memref<128x128xbf16, #tpu.memory_space<vmem>>, vector<128x128xbf16>
    %cst_8 = arith.constant dense<0.000000e+00> : vector<8x128xf32>
    %11 = tpu.matmul %9, %10, %cst_8 {dimension_numbers = #tpu.dot_dimension_numbers<[1], [0], [0], [1], [0, 0, 1, 1], [], []>} : vector<8x128xbf16>, vector<128x128xbf16>, vector<8x128xf32> -> vector<8x128xf32>
    %c0_9 = arith.constant 0 : index
    %c0_10 = arith.constant 0 : index
    %12 = vector.load %arg5[%c0_9, %c0_10] : memref<1x128xf32, #tpu.memory_space<vmem>>, vector<1x128xf32>
    %13 = vector.broadcast %12 : vector<1x128xf32> to vector<8x128xf32>
    %14 = arith.addf %11, %13 : vector<8x128xf32>
    %cst_11 = arith.constant 0.000000e+00 : f32
    %15 = vector.broadcast %cst_11 : f32 to vector<8x128xf32>
    %16 = arith.maximumf %14, %15 : vector<8x128xf32>
    %c0_12 = arith.constant 0 : index
    %c0_13 = arith.constant 0 : index
    %17 = vector.load %arg6[%c0_12, %c0_13] : memref<8x128xf32, #tpu.memory_space<vmem>>, vector<8x128xf32>
    tpu.vector_store %arg6[%c0_12, %c0_13], %16 {strides = array<i32>} : memref<8x128xf32, #tpu.memory_space<vmem>>, vector<8x128xf32>,
    return
  }
  func.func @transform_0(%arg0: i32) -> (i32, i32) {
    %c0_i32 = arith.constant 0 : i32
    %c0_i32_0 = arith.constant 0 : i32
    return %arg0, %c0_i32 : i32, i32
  }
  func.func @transform_1(%arg0: i32) -> (i32, i32) {
    %c0_i32 = arith.constant 0 : i32
    %c0_i32_0 = arith.constant 0 : i32
    %c0_i32_1 = arith.constant 0 : i32
    return %c0_i32, %c0_i32_0 : i32, i32
  }
  func.func @transform_2(%arg0: i32) -> (i32, i32) {
    %c0_i32 = arith.constant 0 : i32
    %c0_i32_0 = arith.constant 0 : i32
    %c0_i32_1 = arith.constant 0 : i32
    return %c0_i32, %c0_i32_0 : i32, i32
  }
  func.func @transform_3(%arg0: i32) -> (i32, i32) {
    %c0_i32 = arith.constant 0 : i32
    %c0_i32_0 = arith.constant 0 : i32
    %c0_i32_1 = arith.constant 0 : i32
    return %c0_i32, %c0_i32_0 : i32, i32
  }
  func.func @transform_4(%arg0: i32) -> (i32, i32) {
    %c0_i32 = arith.constant 0 : i32
    %c0_i32_0 = arith.constant 0 : i32
    %c0_i32_1 = arith.constant 0 : i32
    return %c0_i32, %c0_i32_0 : i32, i32
  }
  func.func @transform_5(%arg0: i32) -> (i32, i32) {
    %c0_i32 = arith.constant 0 : i32
    %c0_i32_0 = arith.constant 0 : i32
    return %arg0, %c0_i32 : i32, i32
  }
}

</mosaic_0001>

<llo_original>
// kernel: tpu_custom_call.1
$region0: #{tpu_custom_call.1}
  #allocation0 [shape = 'u32[]', space=smem, size = 0x4, offset = 0x4, fixed_abs, tag = 'smem constant byte address 0x4 - core index']
  #allocation1 [shape = 'u32[72,128]{1,0:T(1,128)}', space=vmem, size = 0x9000, scoped, tag = 'internal scratch']
  %s0 = inlined_call_operand.hbm [shape: f32[8,128], index: 0, kind: input, shape index: {}]
  %s1 = inlined_call_operand.hbm [shape: bf16[128,128], index: 1, kind: input, shape index: {}]
  %s2 = inlined_call_operand.vmem [shape: f32[1,128], index: 2, kind: input, shape index: {}]
  %s3 = inlined_call_operand.hbm [shape: bf16[128,128], index: 3, kind: input, shape index: {}]
  %s4 = inlined_call_operand.vmem [shape: f32[1,128], index: 4, kind: input, shape index: {}]
  %s5 = inlined_call_operand.hbm [shape: f32[8,128], index: 5, kind: output, shape index: {}]
  %s6 = sld [smem:[#allocation0]]
  $region42: #{tpu_custom_call.1} parent=0
    _
  %s8 = ssub.s32 1, %s6
  %s9 = scalar_select 0, %s8, %s6
  $region1: #{tpu_custom_call.1} parent=0
    #allocation2 [shape = 'u8[4096]{0}', space=vmem, size = 0x1000, scoped, tag = 'input window, operand 0, single buffered']
    #allocation3 [shape = 's32[1]{0}', space=sflag, size = 0x4, scoped, tag = 'scoped memory for tpu_custom_call.1']
    #allocation4 [shape = 's32[1]{0}', space=sflag, size = 0x4, scoped, tag = 'scoped memory for tpu_custom_call.1']
    #allocation5 [shape = 'u8[32768]{0}', space=vmem, size = 0x8000, scoped, tag = 'input window, operand 1, single buffered']
    #allocation6 [shape = 's32[1]{0}', space=sflag, size = 0x4, scoped, tag = 'scoped memory for tpu_custom_call.1']
    #allocation7 [shape = 'u8[32768]{0}', space=vmem, size = 0x8000, scoped, tag = 'input window, operand 3, single buffered']
    #allocation8 [shape = 'u8[4096]{0}', space=vmem, size = 0x1000, scoped, tag = 'output window, operand 0, single buffered']
    %10 = vsyncpa [#allocation3], 0
    %11 = vsyncpa [#allocation6], 0
    %12 = vsyncpa [#allocation4], 0
    // Predicated region
    $region2: #{tpu_custom_call.1} parent=1 // pred_check
      _
    $region3: #{tpu_custom_call.1} parent=1 // pred_check_branch
      %14 = sbr.rel (0) target = $region5
    $region4: #{tpu_custom_call.1} parent=1 // pred_region
      %16 = vsyncadd [#allocation3], 0
      %s18 = sshll.u32 %s0, 4
      %s19 = int_to_ptr.hbm [resolvable:$true] %s18
      %s20 = sshll.u32 [#allocation2], 4
      %s21 = int_to_ptr.vmem [resolvable:$true] %s20
      %23 = dma.hbm_to_vmem [thread:$0]  %s19, 128, %s21, [#allocation3]
    $region5: #{tpu_custom_call.1} parent=1 // pred_fallthru
      _
    // Predicated region
    $region6: #{tpu_custom_call.1} parent=1 // pred_check
      _
    $region7: #{tpu_custom_call.1} parent=1 // pred_check_branch
      %25 = sbr.rel (0) target = $region9
    $region8: #{tpu_custom_call.1} parent=1 // pred_region
      %27 = vsyncadd [#allocation6], 0
      %s28 = sshll.u32 %s1, 4
      %s29 = int_to_ptr.hbm [resolvable:$true] %s28
      %s30 = sshll.u32 [#allocation5], 4
      %s31 = int_to_ptr.vmem [resolvable:$true] %s30
      %36 = dma.hbm_to_vmem [thread:$0]  %s29, 1024, %s31, [#allocation6], 64, 64, 4
    $region9: #{tpu_custom_call.1} parent=1 // pred_fallthru
      _
    // Predicated region
    $region10: #{tpu_custom_call.1} parent=1 // pred_check
      _
    $region11: #{tpu_custom_call.1} parent=1 // pred_check_branch
      %38 = sbr.rel (0) target = $region13
    $region12: #{tpu_custom_call.1} parent=1 // pred_region
      _
    $region13: #{tpu_custom_call.1} parent=1 // pred_fallthru
      _
    // Predicated region
    $region14: #{tpu_custom_call.1} parent=1 // pred_check
      _
    $region15: #{tpu_custom_call.1} parent=1 // pred_check_branch
      %40 = sbr.rel (0) target = $region17
    $region16: #{tpu_custom_call.1} parent=1 // pred_region
      %42 = vsyncadd [#allocation6], 0
      %s43 = sshll.u32 %s3, 4
      %s44 = int_to_ptr.hbm [resolvable:$true] %s43
      %s45 = sshll.u32 [#allocation7], 4
      %s46 = int_to_ptr.vmem [resolvable:$true] %s45
      %51 = dma.hbm_to_vmem [thread:$0]  %s44, 1024, %s46, [#allocation6], 64, 64, 4
    $region17: #{tpu_custom_call.1} parent=1 // pred_fallthru
      _
    // Predicated region
    $region18: #{tpu_custom_call.1} parent=1 // pred_check
      _
    $region19: #{tpu_custom_call.1} parent=1 // pred_check_branch
      %53 = sbr.rel (0) target = $region21
    $region20: #{tpu_custom_call.1} parent=1 // pred_region
      _
    $region21: #{tpu_custom_call.1} parent=1 // pred_fallthru
      _
    // Predicated region
    $region22: #{tpu_custom_call.1} parent=1 // pred_check
      _
    $region23: #{tpu_custom_call.1} parent=1 // pred_check_branch
      %55 = sbr.rel (0) target = $region25
    $region24: #{tpu_custom_call.1} parent=1 // pred_region
      %57 = dma.done [#allocation3], 128
    $region25: #{tpu_custom_call.1} parent=1 // pred_fallthru
      _
    // Predicated region
    $region26: #{tpu_custom_call.1} parent=1 // pred_check
      _
    $region27: #{tpu_custom_call.1} parent=1 // pred_check_branch
      %59 = sbr.rel (0) target = $region29
    $region28: #{tpu_custom_call.1} parent=1 // pred_region
      %61 = dma.done [#allocation6], 1024
    $region29: #{tpu_custom_call.1} parent=1 // pred_fallthru
      _
    // Predicated region
    $region30: #{tpu_custom_call.1} parent=1 // pred_check
      _
    $region31: #{tpu_custom_call.1} parent=1 // pred_check_branch
      %63 = sbr.rel (0) target = $region33
    $region32: #{tpu_custom_call.1} parent=1 // pred_region
      %65 = dma.done [#allocation6], 1024
    $region33: #{tpu_custom_call.1} parent=1 // pred_fallthru
      _
    %v66 = vld [vmem:[#allocation2] sm:$0xff]
    %v67 = vpack.c.bf16 %v66, %v66
    %v68 = vld [vmem:[#allocation5] sm:$0xf]
    %v69 = vld [vmem:[#allocation5 + $0x4] sm:$0xf]
    %v70 = vld [vmem:[#allocation5 + $0x8] sm:$0xf]
    %v71 = vld [vmem:[#allocation5 + $0xc] sm:$0xf]
    %v72 = vld [vmem:[#allocation5 + $0x10] sm:$0xf]
    %v73 = vld [vmem:[#allocation5 + $0x14] sm:$0xf]
    %v74 = vld [vmem:[#allocation5 + $0x18] sm:$0xf]
    %v75 = vld [vmem:[#allocation5 + $0x1c] sm:$0xf]
    %v76 = vld [vmem:[#allocation5 + $0x20] sm:$0xf]
    %v77 = vld [vmem:[#allocation5 + $0x24] sm:$0xf]
    %v78 = vld [vmem:[#allocation5 + $0x28] sm:$0xf]
    %v79 = vld [vmem:[#allocation5 + $0x2c] sm:$0xf]
    %v80 = vld [vmem:[#allocation5 + $0x30] sm:$0xf]
    %v81 = vld [vmem:[#allocation5 + $0x34] sm:$0xf]
    %v82 = vld [vmem:[#allocation5 + $0x38] sm:$0xf]
    %v83 = vld [vmem:[#allocation5 + $0x3c] sm:$0xf]
    %v84 = vld [vmem:[%s2] sm:$0x1]
    %v86 = vperm.slane %v84, 0
    %v104 = vunpack.c.l.b16 %v68
    %v105 = vunpack.c.l.b16 %v69
    %v106 = vunpack.c.l.b16 %v70
    %v107 = vunpack.c.l.b16 %v71
    %v108 = vunpack.c.l.b16 %v72
    %v109 = vunpack.c.l.b16 %v73
    %v110 = vunpack.c.l.b16 %v74
    %v111 = vunpack.c.l.b16 %v75
    %v112 = vunpack.c.l.b16 %v76
    %v113 = vunpack.c.l.b16 %v77
    %v114 = vunpack.c.l.b16 %v78
    %v115 = vunpack.c.l.b16 %v79
    %v116 = vunpack.c.l.b16 %v80
    %v117 = vunpack.c.l.b16 %v81
    %v118 = vunpack.c.l.b16 %v82
    %v119 = vunpack.c.l.b16 %v83
    %v120 = vpack.c.b16 %v105, %v104
    %v121 = vpack.c.b16 %v107, %v106
    %v122 = vpack.c.b16 %v109, %v108
    %v123 = vpack.c.b16 %v111, %v110
    %v124 = vpack.c.b16 %v113, %v112
    %v125 = vpack.c.b16 %v115, %v114
    %v126 = vpack.c.b16 %v117, %v116
    %v127 = vpack.c.b16 %v119, %v118
    %136 = vmatpush.bf16.msra.mxu0 %v127
    %137 = vmatpush.bf16.msra.mxu0 %v126
    %138 = vmatpush.bf16.msra.mxu0 %v125
    %139 = vmatpush.bf16.msra.mxu0 %v124
    %140 = vmatpush.bf16.msra.mxu0 %v123
    %141 = vmatpush.bf16.msra.mxu0 %v122
    %142 = vmatpush.bf16.msra.mxu0 %v121
    %143 = vmatpush.bf16.msra.mxu0 %v120
    %144 = vmatmul.bf16.gmra.mxu0 %v67
    %v145 = vpop.f32.mrf.mxu0
    %v146 = vadd.f32 %v86, %v145
    %v147 = vpop.f32.mrf.mxu0
    %148 = vdwg.mxu0
    %v149 = vmax.f32 %v146, 0.0
    %v150 = vpack.c.bf16 %v149, %v149
    %v151 = vld [vmem:[#allocation7] sm:$0xf]
    %v152 = vld [vmem:[#allocation7 + $0x4] sm:$0xf]
    %v153 = vld [vmem:[#allocation7 + $0x8] sm:$0xf]
    %v154 = vld [vmem:[#allocation7 + $0xc] sm:$0xf]
    %v155 = vld [vmem:[#allocation7 + $0x10] sm:$0xf]
    %v156 = vld [vmem:[#allocation7 + $0x14] sm:$0xf]
    %v157 = vld [vmem:[#allocation7 + $0x18] sm:$0xf]
    %v158 = vld [vmem:[#allocation7 + $0x1c] sm:$0xf]
    %v159 = vld [vmem:[#allocation7 + $0x20] sm:$0xf]
    %v160 = vld [vmem:[#allocation7 + $0x24] sm:$0xf]
    %v161 = vld [vmem:[#allocation7 + $0x28] sm:$0xf]
    %v162 = vld [vmem:[#allocation7 + $0x2c] sm:$0xf]
    %v163 = vld [vmem:[#allocation7 + $0x30] sm:$0xf]
    %v164 = vld [vmem:[#allocation7 + $0x34] sm:$0xf]
    %v165 = vld [vmem:[#allocation7 + $0x38] sm:$0xf]
    %v166 = vld [vmem:[#allocation7 + $0x3c] sm:$0xf]
    %v167 = vld [vmem:[%s4] sm:$0x1]
    %v169 = vperm.slane %v167, 0
    %v187 = vunpack.c.l.b16 %v151
    %v188 = vunpack.c.l.b16 %v152
    %v189 = vunpack.c.l.b16 %v153
    %v190 = vunpack.c.l.b16 %v154
    %v191 = vunpack.c.l.b16 %v155
    %v192 = vunpack.c.l.b16 %v156
    %v193 = vunpack.c.l.b16 %v157
    %v194 = vunpack.c.l.b16 %v158
    %v195 = vunpack.c.l.b16 %v159
    %v196 = vunpack.c.l.b16 %v160
    %v197 = vunpack.c.l.b16 %v161
    %v198 = vunpack.c.l.b16 %v162
    %v199 = vunpack.c.l.b16 %v163
    %v200 = vunpack.c.l.b16 %v164
    %v201 = vunpack.c.l.b16 %v165
    %v202 = vunpack.c.l.b16 %v166
    %v203 = vpack.c.b16 %v188, %v187
    %v204 = vpack.c.b16 %v190, %v189
    %v205 = vpack.c.b16 %v192, %v191
    %v206 = vpack.c.b16 %v194, %v193
    %v207 = vpack.c.b16 %v196, %v195
    %v208 = vpack.c.b16 %v198, %v197
    %v209 = vpack.c.b16 %v200, %v199
    %v210 = vpack.c.b16 %v202, %v201
    %219 = vmatpush.bf16.msra.mxu0 %v210
    %220 = vmatpush.bf16.msra.mxu0 %v209
    %221 = vmatpush.bf16.msra.mxu0 %v208
    %222 = vmatpush.bf16.msra.mxu0 %v207
    %223 = vmatpush.bf16.msra.mxu0 %v206
    %224 = vmatpush.bf16.msra.mxu0 %v205
    %225 = vmatpush.bf16.msra.mxu0 %v204
    %226 = vmatpush.bf16.msra.mxu0 %v203
    %227 = vmatmul.bf16.gmra.mxu0 %v150
    %v228 = vpop.f32.mrf.mxu0
    %v229 = vadd.f32 %v169, %v228
    %v230 = vpop.f32.mrf.mxu0
    %231 = vdwg.mxu0
    %v232 = vmax.f32 %v229, 0.0
    %233 = vst [vmem:[#allocation8] sm:$0xff] %v232
    // Predicated region
    $region34: #{tpu_custom_call.1} parent=1 // pred_check
      _
    $region35: #{tpu_custom_call.1} parent=1 // pred_check_branch
      %235 = sbr.rel (0) target = $region37
    $region36: #{tpu_custom_call.1} parent=1 // pred_region
      %237 = vsyncadd [#allocation4], 0
      %s239 = sshll.u32 [#allocation8], 4
      %s240 = int_to_ptr.vmem [resolvable:$true] %s239
      %s241 = sshll.u32 %s5, 4
      %s242 = int_to_ptr.hbm [resolvable:$true] %s241
      %244 = dma.vmem_to_hbm [thread:$0]  %s240, 128, %s242, [#allocation4]
    $region37: #{tpu_custom_call.1} parent=1 // pred_fallthru
      _
    // Predicated region
    $region38: #{tpu_custom_call.1} parent=1 // pred_check
      _
    $region39: #{tpu_custom_call.1} parent=1 // pred_check_branch
      %246 = sbr.rel (0) target = $region41
    $region40: #{tpu_custom_call.1} parent=1 // pred_region
      %248 = dma.done [#allocation4], 128
    $region41: #{tpu_custom_call.1} parent=1 // pred_fallthru
      _
    %249 = vsyncpa [#allocation3], 1
    %250 = vsyncpa [#allocation6], 1
    %251 = vsyncpa [#allocation4], 1

</llo_original>
